<compile_context>
chip_gen: v7x
topology: tpu7x:2x2x1
jax: 0.10.0
libtpu: 0.0.40
codegen_flags: <defaults>
</compile_context>

<pallas_src>
import functools

import jax
import jax.numpy as jnp
from jax.experimental import pallas as pl
from jax.experimental.pallas import tpu as pltpu


def _round_up(x, m):
    return (x + m - 1) // m * m


# -----------------------------------------------------------------------------
# Pallas kernel: Linear -> LayerNorm -> LeakyReLU(0.2) -> (Dropout=id) -> Linear
# -----------------------------------------------------------------------------
def _projection_kernel(x_ref, w1_ref, lnp_ref, w2_ref, b2_ref, o_ref):
    # Linear 1 in the streaming dtype (bf16 feeds the MXU natively when the
    # inputs are bf16); accumulation is always f32.
    h = jnp.dot(x_ref[...], w1_ref[...], preferred_element_type=jnp.float32)
    h = h + lnp_ref[0:1, :]                       # + b1 (f32, lane-broadcast)

    # LayerNorm over the last dim, eps = 1e-5 (torch default).
    # Fused statistics: one pass computes sum and sum-of-squares (XLU reduces).
    inv_h = 1.0 / h.shape[-1]
    s1 = jnp.sum(h, axis=-1, keepdims=True)
    s2 = jnp.sum(h * h, axis=-1, keepdims=True)
    mean = s1 * inv_h
    var = jnp.maximum(s2 * inv_h - mean * mean, 0.0)
    h = (h - mean) * jax.lax.rsqrt(var + 1e-5)     # rsqrt -> EUP slot
    h = h * lnp_ref[1:2, :] + lnp_ref[2:3, :]      # gamma, beta (f32)

    # LeakyReLU(negative_slope=0.2).  Dropout(p=0.1) is identity at inference.
    h = jnp.where(h > 0, h, 0.2 * h)

    # Linear 2 (output columns zero-padded to a 128-lane multiple upstream,
    # so the store below is a full, unmasked vst).
    out = jnp.dot(h.astype(w2_ref.dtype), w2_ref[...],
                  preferred_element_type=jnp.float32)
    out = out + b2_ref[...].astype(jnp.float32)

    o_ref[...] = out.astype(o_ref.dtype)


# -----------------------------------------------------------------------------
# Wrapper
# -----------------------------------------------------------------------------
@functools.partial(jax.jit, static_argnames=("block_b",))
def text_encoder_forward(last_hidden_state, params, *, block_b=None):
    """Mirror of TextEncoder.forward, minus tokenizer/transformer.

    Args:
      last_hidden_state: (B, S, D) array (stand-in for the frozen transformer
        output), f32 or bf16.
      params: dict with w1 (D,H), b1 (H,), gamma (H,), beta (H,), w2 (H,L),
        b2 (L,).  f32 or bf16.
    Returns:
      latent: (B, L) in last_hidden_state's dtype.
    """
    B, S, D = last_hidden_state.shape
    H = params["w1"].shape[1]
    L = params["w2"].shape[1]
    x_dtype = last_hidden_state.dtype

    # Sublane tile of the activation stream: f32 -> 8, bf16/f16 -> 16, 8-bit -> 32.
    itemsize = jnp.dtype(x_dtype).itemsize
    sub = {4: 8, 2: 16, 1: 32}.get(itemsize, 8)

    if block_b is None:
        # Largest MXU-friendly tile: whole (tile-rounded) batch if small, else
        # 256 rows (v6e/v7x MXU geometry; a multiple of v5e's 128-row MXU).
        block_b = max(sub, min(_round_up(B, sub), 256))
        # v7x megacore: prefer >= 2 grid steps on the 'parallel' axis when the
        # batch is big enough to split.
        if _round_up(B, block_b) // block_b < 2 and B >= 2 * sub:
            block_b = _round_up((B + 1) // 2, sub)
    assert block_b % sub == 0, "block_b must be a multiple of the sublane tile"

    Bp = _round_up(B, block_b)          # padded batch (full tiles)
    Lp = _round_up(L, 128)              # lane-dense output width

    # Lane-dense output: zero-pad the second Linear to a 128-lane multiple.
    w2 = params["w2"]
    b2 = params["b2"].reshape(1, L)
    if Lp != L:
        w2 = jnp.pad(w2, ((0, 0), (0, Lp - L)))
        b2 = jnp.pad(b2, ((0, 0), (0, Lp - L)))

    # Pack b1 / gamma / beta into one (3, H) f32 operand (single tiny DMA);
    # LayerNorm / LeakyReLU math stays f32 (v5e has no bf16 VPU/EUP).
    lnp = jnp.stack(
        [params["b1"], params["gamma"], params["beta"]], axis=0
    ).astype(jnp.float32)

    # CLS extraction.  Fast path: fold it into the kernel DMA by viewing
    # (B, S, D) as (B, S*D); the BlockSpec reads only the first D lanes of each
    # row (the CLS slab), so no separate XLA slice pass over HBM.
    if D % 128 == 0 and Bp == B:
        x = last_hidden_state.reshape(B, S * D)
    else:
        x = last_hidden_state[:, 0, :]
        if Bp != B:
            x = jnp.pad(x, ((0, Bp - B), (0, 0)))

    grid = (Bp // block_b,)
    resident = dict(pipeline_mode=pl.Buffered(1))   # grid-invariant operands

    itemsize_w = jnp.dtype(params["w1"].dtype).itemsize
    cost = pl.CostEstimate(
        flops=int(2 * Bp * D * H + 2 * Bp * H * Lp),
        transcendentals=int(Bp),                       # one rsqrt per row
        bytes_accessed=int(
            Bp * D * itemsize
            + (D * H + H * Lp + Lp) * itemsize_w
            + 3 * H * 4
            + Bp * Lp * itemsize
        ),
    )

    out = pl.pallas_call(
        _projection_kernel,
        out_shape=jax.ShapeDtypeStruct((Bp, Lp), x_dtype),
        grid_spec=pltpu.PrefetchScalarGridSpec(
            num_scalar_prefetch=0,
            grid=grid,
            in_specs=[
                pl.BlockSpec((block_b, D), lambda i: (i, 0)),            # x / CLS
                pl.BlockSpec((D, H), lambda i: (0, 0), **resident),      # W1
                pl.BlockSpec((3, H), lambda i: (0, 0), **resident),      # b1/g/b
                pl.BlockSpec((H, Lp), lambda i: (0, 0), **resident),     # W2
                pl.BlockSpec((1, Lp), lambda i: (0, 0), **resident),     # b2
            ],
            out_specs=pl.BlockSpec((block_b, Lp), lambda i: (i, 0)),
        ),
        compiler_params=pltpu.CompilerParams(
            dimension_semantics=("parallel",),
            vmem_limit_bytes=64 * 1024 * 1024,
        ),
        cost_estimate=cost,
    )(x, params["w1"], lnp, w2, b2)

    return out[:B, :L]


# -----------------------------------------------------------------------------
# Pure-JAX reference for correctness (PyTorch semantics)
# -----------------------------------------------------------------------------
def reference_forward(last_hidden_state, params):
    x = last_hidden_state[:, 0, :].astype(jnp.float32)
    h = x @ params["w1"].astype(jnp.float32) + params["b1"].astype(jnp.float32)
    mean = jnp.mean(h, axis=-1, keepdims=True)
    var = jnp.mean((h - mean) ** 2, axis=-1, keepdims=True)
    h = (h - mean) / jnp.sqrt(var + 1e-5)
    h = h * params["gamma"].astype(jnp.float32) + params["beta"].astype(jnp.float32)
    h = jnp.where(h > 0, h, 0.2 * h)
    out = h @ params["w2"].astype(jnp.float32) + params["b2"].astype(jnp.float32)
    return out


# -----------------------------------------------------------------------------
# Deterministic parameter init (shapes from __init__: transformer_dim -> 2*L -> L)
# -----------------------------------------------------------------------------
def init_params(key, transformer_dim, latent_dim, dtype=jnp.float32):
    hidden = latent_dim * 2
    k1, k2, k3, k4 = jax.random.split(key, 4)
    s1 = 1.0 / jnp.sqrt(transformer_dim)
    s2 = 1.0 / jnp.sqrt(hidden)
    return {
        "w1": jax.random.uniform(k1, (transformer_dim, hidden), dtype, -s1, s1),
        "b1": jax.random.uniform(k2, (hidden,), dtype, -s1, s1),
        "gamma": jnp.ones((hidden,), dtype),
        "beta": jnp.zeros((hidden,), dtype),
        "w2": jax.random.uniform(k3, (hidden, latent_dim), dtype, -s2, s2),
        "b2": jax.random.uniform(k4, (latent_dim,), dtype, -s2, s2),
    }


if __name__ == "__main__":
    # Small shapes consistent with the forward pass:
    #   batch=8 prompts, seq(max_length)=8, transformer_dim=128,
    #   latent_dim=64 (projection hidden = 128).
    B, S, D, LATENT = 8, 8, 128, 64

    key = jax.random.PRNGKey(0)
    k_x, k_p = jax.random.split(key)

    # Stand-in for the frozen pretrained transformer's last_hidden_state.
    last_hidden_state = jax.random.normal(k_x, (B, S, D), dtype=jnp.float32)
    params = init_params(k_p, transformer_dim=D, latent_dim=LATENT)

    # f32 path — exact check against the reference.
    latent = jax.block_until_ready(text_encoder_forward(last_hidden_state, params))
    ref = reference_forward(last_hidden_state, params)
    assert latent.shape == (B, LATENT), latent.shape
    assert jnp.allclose(latent.astype(jnp.float32), ref, atol=1e-4, rtol=1e-4), (
        float(jnp.max(jnp.abs(latent.astype(jnp.float32) - ref))))

    # bf16 streaming path (bf16 MXU feed, f32 accumulation/LayerNorm) — loose check.
    lhs_bf16 = last_hidden_state.astype(jnp.bfloat16)
    params_bf16 = {k: v.astype(jnp.bfloat16) for k, v in params.items()}
    latent_bf16 = jax.block_until_ready(
        text_encoder_forward(lhs_bf16, params_bf16))
    latent_bf16_f32 = latent_bf16.astype(jnp.float32)
    assert latent_bf16.shape == (B, LATENT), latent_bf16.shape
    assert bool(jnp.all(jnp.isfinite(latent_bf16_f32)))
    assert float(jnp.max(jnp.abs(latent_bf16_f32 - ref))) < 0.25

    print("KERNEL_OK")
</pallas_src>

<mosaic_0001>
module attributes {stable_mosaic.version = 11 : i64} {
  func.func @_projection_kernel(%arg0: i32, %arg1: memref<8x128xf32, #tpu.memory_space<vmem>>, %arg2: memref<128x128xf32, #tpu.memory_space<vmem>>, %arg3: memref<3x128xf32, #tpu.memory_space<vmem>>, %arg4: memref<128x128xf32, #tpu.memory_space<vmem>>, %arg5: memref<1x128xf32, #tpu.memory_space<vmem>>, %arg6: memref<8x128xf32, #tpu.memory_space<vmem>>) attributes {dimension_semantics = [#tpu.dimension_semantics<parallel>], iteration_bounds = array<i64: 1>, scalar_prefetch = 0 : i64, scratch_operands = 0 : i64, tpu.core_type = #tpu.core_type<tc>, window_params = [{transform_indices = @transform_0, window_bounds = array<i64: 8, 128>}, {pipeline_mode = #tpu.pipeline_mode<synchronous>, transform_indices = @transform_1, window_bounds = array<i64: 128, 128>}, {pipeline_mode = #tpu.pipeline_mode<synchronous>, transform_indices = @transform_2, window_bounds = array<i64: 3, 128>}, {pipeline_mode = #tpu.pipeline_mode<synchronous>, transform_indices = @transform_3, window_bounds = array<i64: 128, 128>}, {pipeline_mode = #tpu.pipeline_mode<synchronous>, transform_indices = @transform_4, window_bounds = array<i64: 1, 128>}, {transform_indices = @transform_5, window_bounds = array<i64: 8, 128>}]} {
    %c0 = arith.constant 0 : index
    %c0_0 = arith.constant 0 : index
    %0 = vector.load %arg1[%c0, %c0_0] : memref<8x128xf32, #tpu.memory_space<vmem>>, vector<8x128xf32>
    %c0_1 = arith.constant 0 : index
    %c0_2 = arith.constant 0 : index
    %1 = vector.load %arg2[%c0_1, %c0_2] : memref<128x128xf32, #tpu.memory_space<vmem>>, vector<128x128xf32>
    %cst = arith.constant dense<0.000000e+00> : vector<8x128xf32>
    %2 = tpu.matmul %0, %1, %cst {dimension_numbers = #tpu.dot_dimension_numbers<[1], [0], [0], [1], [0, 0, 1, 1], [], []>} : vector<8x128xf32>, vector<128x128xf32>, vector<8x128xf32> -> vector<8x128xf32>
    %c0_3 = arith.constant 0 : index
    %c0_4 = arith.constant 0 : index
    %3 = vector.load %arg3[%c0_3, %c0_4] : memref<3x128xf32, #tpu.memory_space<vmem>>, vector<1x128xf32>
    %4 = vector.broadcast %3 : vector<1x128xf32> to vector<8x128xf32>
    %5 = arith.addf %2, %4 : vector<8x128xf32>
    %cst_5 = arith.constant dense<0.000000e+00> : vector<8xf32>
    %6 = vector.multi_reduction <add>, %5, %cst_5 [1] : vector<8x128xf32> to vector<8xf32>
    %7 = vector.shape_cast %6 : vector<8xf32> to vector<8x1xf32>
    %8 = arith.mulf %5, %5 : vector<8x128xf32>
    %cst_6 = arith.constant dense<0.000000e+00> : vector<8xf32>
    %9 = vector.multi_reduction <add>, %8, %cst_6 [1] : vector<8x128xf32> to vector<8xf32>
    %10 = vector.shape_cast %9 : vector<8xf32> to vector<8x1xf32>
    %cst_7 = arith.constant 7.812500e-03 : f32
    %11 = vector.broadcast %cst_7 : f32 to vector<8x1xf32>
    %12 = arith.mulf %7, %11 : vector<8x1xf32>
    %cst_8 = arith.constant 7.812500e-03 : f32
    %13 = vector.broadcast %cst_8 : f32 to vector<8x1xf32>
    %14 = arith.mulf %10, %13 : vector<8x1xf32>
    %15 = arith.mulf %12, %12 : vector<8x1xf32>
    %16 = arith.subf %14, %15 : vector<8x1xf32>
    %cst_9 = arith.constant 0.000000e+00 : f32
    %17 = vector.broadcast %cst_9 : f32 to vector<8x1xf32>
    %18 = arith.maximumf %16, %17 : vector<8x1xf32>
    %19 = vector.broadcast %12 : vector<8x1xf32> to vector<8x128xf32>
    %20 = arith.subf %5, %19 : vector<8x128xf32>
    %cst_10 = arith.constant 9.99999974E-6 : f32
    %21 = vector.broadcast %cst_10 : f32 to vector<8x1xf32>
    %22 = arith.addf %18, %21 : vector<8x1xf32>
    %23 = math.rsqrt %22 : vector<8x1xf32>
    %24 = vector.broadcast %23 : vector<8x1xf32> to vector<8x128xf32>
    %25 = arith.mulf %20, %24 : vector<8x128xf32>
    %c1 = arith.constant 1 : index
    %c0_11 = arith.constant 0 : index
    %26 = vector.load %arg3[%c1, %c0_11] : memref<3x128xf32, #tpu.memory_space<vmem>>, vector<1x128xf32>
    %27 = vector.broadcast %26 : vector<1x128xf32> to vector<8x128xf32>
    %28 = arith.mulf %25, %27 : vector<8x128xf32>
    %c2 = arith.constant 2 : index
    %c0_12 = arith.constant 0 : index
    %29 = vector.load %arg3[%c2, %c0_12] : memref<3x128xf32, #tpu.memory_space<vmem>>, vector<1x128xf32>
    %30 = vector.broadcast %29 : vector<1x128xf32> to vector<8x128xf32>
    %31 = arith.addf %28, %30 : vector<8x128xf32>
    %cst_13 = arith.constant 0.000000e+00 : f32
    %32 = vector.broadcast %cst_13 : f32 to vector<8x128xf32>
    %33 = arith.cmpf ogt, %31, %32 : vector<8x128xf32>
    %cst_14 = arith.constant 2.000000e-01 : f32
    %34 = vector.broadcast %cst_14 : f32 to vector<8x128xf32>
    %35 = arith.mulf %34, %31 : vector<8x128xf32>
    %36 = arith.select %33, %31, %35 : vector<8x128xi1>, vector<8x128xf32>
    %c0_15 = arith.constant 0 : index
    %c0_16 = arith.constant 0 : index
    %37 = vector.load %arg4[%c0_15, %c0_16] : memref<128x128xf32, #tpu.memory_space<vmem>>, vector<128x128xf32>
    %cst_17 = arith.constant dense<0.000000e+00> : vector<8x128xf32>
    %38 = tpu.matmul %36, %37, %cst_17 {dimension_numbers = #tpu.dot_dimension_numbers<[1], [0], [0], [1], [0, 0, 1, 1], [], []>} : vector<8x128xf32>, vector<128x128xf32>, vector<8x128xf32> -> vector<8x128xf32>
    %c0_18 = arith.constant 0 : index
    %c0_19 = arith.constant 0 : index
    %39 = vector.load %arg5[%c0_18, %c0_19] : memref<1x128xf32, #tpu.memory_space<vmem>>, vector<1x128xf32>
    %40 = vector.broadcast %39 : vector<1x128xf32> to vector<8x128xf32>
    %41 = arith.addf %38, %40 : vector<8x128xf32>
    %c0_20 = arith.constant 0 : index
    %c0_21 = arith.constant 0 : index
    %42 = vector.load %arg6[%c0_20, %c0_21] : memref<8x128xf32, #tpu.memory_space<vmem>>, vector<8x128xf32>
    tpu.vector_store %arg6[%c0_20, %c0_21], %41 {strides = array<i32>} : memref<8x128xf32, #tpu.memory_space<vmem>>, vector<8x128xf32>,
    return
  }
  func.func @transform_0(%arg0: i32) -> (i32, i32) {
    %c0_i32 = arith.constant 0 : i32
    %c0_i32_0 = arith.constant 0 : i32
    return %arg0, %c0_i32 : i32, i32
  }
  func.func @transform_1(%arg0: i32) -> (i32, i32) {
    %c0_i32 = arith.constant 0 : i32
    %c0_i32_0 = arith.constant 0 : i32
    %c0_i32_1 = arith.constant 0 : i32
    return %c0_i32, %c0_i32_0 : i32, i32
  }
  func.func @transform_2(%arg0: i32) -> (i32, i32) {
    %c0_i32 = arith.constant 0 : i32
    %c0_i32_0 = arith.constant 0 : i32
    %c0_i32_1 = arith.constant 0 : i32
    return %c0_i32, %c0_i32_0 : i32, i32
  }
  func.func @transform_3(%arg0: i32) -> (i32, i32) {
    %c0_i32 = arith.constant 0 : i32
    %c0_i32_0 = arith.constant 0 : i32
    %c0_i32_1 = arith.constant 0 : i32
    return %c0_i32, %c0_i32_0 : i32, i32
  }
  func.func @transform_4(%arg0: i32) -> (i32, i32) {
    %c0_i32 = arith.constant 0 : i32
    %c0_i32_0 = arith.constant 0 : i32
    %c0_i32_1 = arith.constant 0 : i32
    return %c0_i32, %c0_i32_0 : i32, i32
  }
  func.func @transform_5(%arg0: i32) -> (i32, i32) {
    %c0_i32 = arith.constant 0 : i32
    %c0_i32_0 = arith.constant 0 : i32
    return %arg0, %c0_i32 : i32, i32
  }
}

</mosaic_0001>

<llo_original>
// kernel: text_encoder_forward.1
$region0: #{text_encoder_forward.1}
  #allocation0 [shape = 'u32[]', space=smem, size = 0x4, offset = 0x4, fixed_abs, tag = 'smem constant byte address 0x4 - core index']
  #allocation1 [shape = 'u32[144,128]{1,0:T(1,128)}', space=vmem, size = 0x12000, scoped, tag = 'internal scratch']
  %s0 = inlined_call_operand.hbm [shape: f32[8,1024], index: 0, kind: input, shape index: {}]
  %s1 = inlined_call_operand.hbm [shape: f32[128,128], index: 1, kind: input, shape index: {}]
  %s2 = inlined_call_operand.hbm [shape: f32[3,128], index: 2, kind: input, shape index: {}]
  %s3 = inlined_call_operand.hbm [shape: f32[128,128], index: 3, kind: input, shape index: {}]
  %s4 = inlined_call_operand.hbm [shape: f32[1,128], index: 4, kind: input, shape index: {}]
  %s5 = inlined_call_operand.hbm [shape: f32[8,128], index: 5, kind: output, shape index: {}]
  %s6 = sld [smem:[#allocation0]]
  $region50: #{text_encoder_forward.1} parent=0
    _
  %s8 = ssub.s32 1, %s6
  %s9 = scalar_select 0, %s8, %s6
  $region1: #{text_encoder_forward.1} parent=0
    #allocation2 [shape = 'u8[4096]{0}', space=vmem, size = 0x1000, scoped, tag = 'input window, operand 0, single buffered']
    #allocation3 [shape = 's32[1]{0}', space=sflag, size = 0x4, scoped, tag = 'scoped memory for text_encoder_forward.1']
    #allocation4 [shape = 's32[1]{0}', space=sflag, size = 0x4, scoped, tag = 'scoped memory for text_encoder_forward.1']
    #allocation5 [shape = 'u8[65536]{0}', space=vmem, size = 0x10000, scoped, tag = 'input window, operand 1, single buffered']
    #allocation6 [shape = 's32[1]{0}', space=sflag, size = 0x4, scoped, tag = 'scoped memory for text_encoder_forward.1']
    #allocation7 [shape = 'u8[2048]{0}', space=vmem, size = 0x800, scoped, tag = 'input window, operand 2, single buffered']
    #allocation8 [shape = 'u8[65536]{0}', space=vmem, size = 0x10000, scoped, tag = 'input window, operand 3, single buffered']
    #allocation9 [shape = 's32[1]{0}', space=sflag, size = 0x4, scoped, tag = 'scoped memory for text_encoder_forward.1']
    #allocation10 [shape = 'u8[512]{0}', space=vmem, size = 0x400, scoped, tag = 'input window, operand 4, single buffered']
    #allocation11 [shape = 'u8[4096]{0}', space=vmem, size = 0x1000, scoped, tag = 'output window, operand 0, single buffered']
    %10 = vsyncpa [#allocation3], 0
    %11 = vsyncpa [#allocation6], 0
    %12 = vsyncpa [#allocation9], 0
    %13 = vsyncpa [#allocation4], 0
    // Predicated region
    $region2: #{text_encoder_forward.1} parent=1 // pred_check
      _
    $region3: #{text_encoder_forward.1} parent=1 // pred_check_branch
      %15 = sbr.rel (0) target = $region5
    $region4: #{text_encoder_forward.1} parent=1 // pred_region
      %s17 = ssub.s32 128, 128
      %18 = vsyncadd [#allocation3], %s17
      %s20 = sshll.u32 [#allocation2], 4
      %s21 = int_to_ptr.vmem [resolvable:$true] %s20
      %23 = dma.hbm_to_vmem [thread:$0]  %s0, 128, %s21, [#allocation3]
    $region5: #{text_encoder_forward.1} parent=1 // pred_fallthru
      _
    // Predicated region
    $region6: #{text_encoder_forward.1} parent=1 // pred_check
      _
    $region7: #{text_encoder_forward.1} parent=1 // pred_check_branch
      %25 = sbr.rel (0) target = $region9
    $region8: #{text_encoder_forward.1} parent=1 // pred_region
      %s27 = ssub.s32 2048, 2048
      %28 = vsyncadd [#allocation6], %s27
      %s29 = sshll.u32 [#allocation5], 4
      %s30 = int_to_ptr.vmem [resolvable:$true] %s29
      %35 = dma.hbm_to_vmem [thread:$0]  %s1, 2048, %s30, [#allocation6], 128, 128, 8
    $region9: #{text_encoder_forward.1} parent=1 // pred_fallthru
      _
    // Predicated region
    $region10: #{text_encoder_forward.1} parent=1 // pred_check
      _
    $region11: #{text_encoder_forward.1} parent=1 // pred_check_branch
      %37 = sbr.rel (0) target = $region13
    $region12: #{text_encoder_forward.1} parent=1 // pred_region
      %s39 = ssub.s32 64, 64
      %40 = vsyncadd [#allocation6], %s39
      %s42 = sshll.u32 [#allocation7], 4
      %s43 = int_to_ptr.vmem [resolvable:$true] %s42
      %45 = dma.hbm_to_vmem [thread:$0]  %s2, 64, %s43, [#allocation6]
    $region13: #{text_encoder_forward.1} parent=1 // pred_fallthru
      _
    // Predicated region
    $region14: #{text_encoder_forward.1} parent=1 // pred_check
      _
    $region15: #{text_encoder_forward.1} parent=1 // pred_check_branch
      %47 = sbr.rel (0) target = $region17
    $region16: #{text_encoder_forward.1} parent=1 // pred_region
      %s49 = ssub.s32 2048, 2048
      %50 = vsyncadd [#allocation9], %s49
      %s51 = sshll.u32 [#allocation8], 4
      %s52 = int_to_ptr.vmem [resolvable:$true] %s51
      %57 = dma.hbm_to_vmem [thread:$0]  %s3, 2048, %s52, [#allocation9], 128, 128, 8
    $region17: #{text_encoder_forward.1} parent=1 // pred_fallthru
      _
    // Predicated region
    $region18: #{text_encoder_forward.1} parent=1 // pred_check
      _
    $region19: #{text_encoder_forward.1} parent=1 // pred_check_branch
      %59 = sbr.rel (0) target = $region21
    $region20: #{text_encoder_forward.1} parent=1 // pred_region
      %s61 = ssub.s32 16, 16
      %62 = vsyncadd [#allocation9], %s61
      %s64 = sshll.u32 [#allocation10], 4
      %s65 = int_to_ptr.vmem [resolvable:$true] %s64
      %67 = dma.hbm_to_vmem [thread:$0]  %s4, 16, %s65, [#allocation9]
    $region21: #{text_encoder_forward.1} parent=1 // pred_fallthru
      _
    // Predicated region
    $region22: #{text_encoder_forward.1} parent=1 // pred_check
      _
    $region23: #{text_encoder_forward.1} parent=1 // pred_check_branch
      %69 = sbr.rel (0) target = $region25
    $region24: #{text_encoder_forward.1} parent=1 // pred_region
      %70 = dma.done [#allocation3], 128
    $region25: #{text_encoder_forward.1} parent=1 // pred_fallthru
      _
    // Predicated region
    $region26: #{text_encoder_forward.1} parent=1 // pred_check
      _
    $region27: #{text_encoder_forward.1} parent=1 // pred_check_branch
      %72 = sbr.rel (0) target = $region29
    $region28: #{text_encoder_forward.1} parent=1 // pred_region
      %73 = dma.done [#allocation6], 2048
    $region29: #{text_encoder_forward.1} parent=1 // pred_fallthru
      _
    // Predicated region
    $region30: #{text_encoder_forward.1} parent=1 // pred_check
      _
    $region31: #{text_encoder_forward.1} parent=1 // pred_check_branch
      %75 = sbr.rel (0) target = $region33
    $region32: #{text_encoder_forward.1} parent=1 // pred_region
      %76 = dma.done [#allocation6], 64
    $region33: #{text_encoder_forward.1} parent=1 // pred_fallthru
      _
    // Predicated region
    $region34: #{text_encoder_forward.1} parent=1 // pred_check
      _
    $region35: #{text_encoder_forward.1} parent=1 // pred_check_branch
      %78 = sbr.rel (0) target = $region37
    $region36: #{text_encoder_forward.1} parent=1 // pred_region
      %79 = dma.done [#allocation9], 2048
    $region37: #{text_encoder_forward.1} parent=1 // pred_fallthru
      _
    // Predicated region
    $region38: #{text_encoder_forward.1} parent=1 // pred_check
      _
    $region39: #{text_encoder_forward.1} parent=1 // pred_check_branch
      %81 = sbr.rel (0) target = $region41
    $region40: #{text_encoder_forward.1} parent=1 // pred_region
      %82 = dma.done [#allocation9], 16
    $region41: #{text_encoder_forward.1} parent=1 // pred_fallthru
      _
    %v83 = vld [vmem:[#allocation2] sm:$0xff]
    %v84 = vld [vmem:[#allocation5] sm:$0xff]
    %v85 = vld [vmem:[#allocation5 + $0x8] sm:$0xff]
    %v86 = vld [vmem:[#allocation5 + $0x10] sm:$0xff]
    %v87 = vld [vmem:[#allocation5 + $0x18] sm:$0xff]
    %v88 = vld [vmem:[#allocation5 + $0x20] sm:$0xff]
    %v89 = vld [vmem:[#allocation5 + $0x28] sm:$0xff]
    %v90 = vld [vmem:[#allocation5 + $0x30] sm:$0xff]
    %v91 = vld [vmem:[#allocation5 + $0x38] sm:$0xff]
    %v92 = vld [vmem:[#allocation5 + $0x40] sm:$0xff]
    %v93 = vld [vmem:[#allocation5 + $0x48] sm:$0xff]
    %v94 = vld [vmem:[#allocation5 + $0x50] sm:$0xff]
    %v95 = vld [vmem:[#allocation5 + $0x58] sm:$0xff]
    %v96 = vld [vmem:[#allocation5 + $0x60] sm:$0xff]
    %v97 = vld [vmem:[#allocation5 + $0x68] sm:$0xff]
    %v98 = vld [vmem:[#allocation5 + $0x70] sm:$0xff]
    %v99 = vld [vmem:[#allocation5 + $0x78] sm:$0xff]
    %v100 = vld [vmem:[#allocation7] sm:$0x1]
    %v101 = vlaneseq
    %v102 = vshrl.u32 %v101, 7
    %v103 = vsub.s32 0, %v102
    %v104 = vrot.slane %v100, %v103
    %105 = vmatprep.subr.mxu0 0.0
    %106 = vmatpush1.msra.mxu0 %v84
    %107 = vmatprep.subr.mxu0 0.0
    %108 = vmatpush1.msra.mxu0 %v85
    %109 = vmatprep.subr.mxu0 0.0
    %110 = vmatpush1.msra.mxu0 %v86
    %111 = vmatprep.subr.mxu0 0.0
    %112 = vmatpush1.msra.mxu0 %v87
    %113 = vmatprep.subr.mxu0 0.0
    %114 = vmatpush1.msra.mxu0 %v88
    %115 = vmatprep.subr.mxu0 0.0
    %116 = vmatpush1.msra.mxu0 %v89
    %117 = vmatprep.subr.mxu0 0.0
    %118 = vmatpush1.msra.mxu0 %v90
    %119 = vmatprep.subr.mxu0 0.0
    %120 = vmatpush1.msra.mxu0 %v91
    %121 = vmatprep.subr.mxu0 0.0
    %122 = vmatpush1.msra.mxu0 %v92
    %123 = vmatprep.subr.mxu0 0.0
    %124 = vmatpush1.msra.mxu0 %v93
    %125 = vmatprep.subr.mxu0 0.0
    %126 = vmatpush1.msra.mxu0 %v94
    %127 = vmatprep.subr.mxu0 0.0
    %128 = vmatpush1.msra.mxu0 %v95
    %129 = vmatprep.subr.mxu0 0.0
    %130 = vmatpush1.msra.mxu0 %v96
    %131 = vmatprep.subr.mxu0 0.0
    %132 = vmatpush1.msra.mxu0 %v97
    %133 = vmatprep.subr.mxu0 0.0
    %134 = vmatpush1.msra.mxu0 %v98
    %135 = vmatprep.subr.mxu0 0.0
    %136 = vmatpush1.msra.mxu0 %v99
    %137 = vmatprep.subr.mxu0 0.0
    %138 = vmatpush1.msra.mxu0 0.0
    %139 = vmatprep.subr.mxu0 0.0
    %140 = vmatpush1.msra.mxu0 0.0
    %141 = vmatprep.subr.mxu0 0.0
    %142 = vmatpush1.msra.mxu0 0.0
    %143 = vmatprep.subr.mxu0 0.0
    %144 = vmatpush1.msra.mxu0 0.0
    %145 = vmatprep.subr.mxu0 0.0
    %146 = vmatpush1.msra.mxu0 0.0
    %147 = vmatprep.subr.mxu0 0.0
    %148 = vmatpush1.msra.mxu0 0.0
    %149 = vmatprep.subr.mxu0 0.0
    %150 = vmatpush1.msra.mxu0 0.0
    %151 = vmatprep.subr.mxu0 0.0
    %152 = vmatpush1.msra.mxu0 0.0
    %153 = vmatprep.subr.mxu0 0.0
    %154 = vmatpush1.msra.mxu0 0.0
    %155 = vmatprep.subr.mxu0 0.0
    %156 = vmatpush1.msra.mxu0 0.0
    %157 = vmatprep.subr.mxu0 0.0
    %158 = vmatpush1.msra.mxu0 0.0
    %159 = vmatprep.subr.mxu0 0.0
    %160 = vmatpush1.msra.mxu0 0.0
    %161 = vmatprep.subr.mxu0 0.0
    %162 = vmatpush1.msra.mxu0 0.0
    %163 = vmatprep.subr.mxu0 0.0
    %164 = vmatpush1.msra.mxu0 0.0
    %165 = vmatprep.subr.mxu0 0.0
    %166 = vmatpush1.msra.mxu0 0.0
    %167 = vmatprep.subr.mxu0 0.0
    %168 = vmatpush1.msra.mxu0 0.0
    %169 = vmatprep.mubr.f32.mxu0 0.0
    %170 = vmatmul.mubr.f32.gmra.mrb[0].mxu0 %v83
    %v171 = vpop.f32.mrb[0].mxu0
    %v172 = vadd.f32 %v104, %v171
    %v173 = vpop.f32.mrb[0].mxu0
    %174 = vdwg.mxu0
    %175 = vadd.xlane.f32.xlu0 %v172
    %v176 = vpop.xlane.xlu0 %175
    %v177 = vmul.f32 %v172, %v172
    %178 = vadd.xlane.f32.xlu0 %v177
    %v179 = vpop.xlane.xlu0 %178
    %v180 = vmul.f32 %v176, 0.0078125
    %v181 = vmul.f32 %v179, 0.0078125
    %v182 = vmul.f32 %v180, %v180
    %v183 = vsub.f32 %v181, %v182
    %v184 = vmax.f32 %v183, 0.0
    %v185 = vsub.f32 %v172, %v180
    %v186 = vadd.f32 %v184, 1e-05
    %v187 = vrsqrt.pop %v186
    %v188 = vmul.f32 %v185, %v187
    %v189 = vld [vmem:[#allocation7 + $0x1] sm:$0x1]
    %v190 = vlaneseq
    %v191 = vshrl.u32 %v190, 7
    %v192 = vsub.s32 0, %v191
    %v193 = vrot.slane %v189, %v192
    %v194 = vmul.f32 %v188, %v193
    %v195 = vld [vmem:[#allocation7 + $0x2] sm:$0x1]
    %v196 = vlaneseq
    %v197 = vshrl.u32 %v196, 7
    %v198 = vsub.s32 0, %v197
    %v199 = vrot.slane %v195, %v198
    %v200 = vadd.f32 %v194, %v199
    %vm201 = vcmp.gt.f32.partialorder %v200, 0.0
    %v202 = vmul.f32 %v200, 0.2
    %v203 = vsel %vm201, %v200, %v202
    %v204 = vld [vmem:[#allocation8] sm:$0xff]
    %v205 = vld [vmem:[#allocation8 + $0x8] sm:$0xff]
    %v206 = vld [vmem:[#allocation8 + $0x10] sm:$0xff]
    %v207 = vld [vmem:[#allocation8 + $0x18] sm:$0xff]
    %v208 = vld [vmem:[#allocation8 + $0x20] sm:$0xff]
    %v209 = vld [vmem:[#allocation8 + $0x28] sm:$0xff]
    %v210 = vld [vmem:[#allocation8 + $0x30] sm:$0xff]
    %v211 = vld [vmem:[#allocation8 + $0x38] sm:$0xff]
    %v212 = vld [vmem:[#allocation8 + $0x40] sm:$0xff]
    %v213 = vld [vmem:[#allocation8 + $0x48] sm:$0xff]
    %v214 = vld [vmem:[#allocation8 + $0x50] sm:$0xff]
    %v215 = vld [vmem:[#allocation8 + $0x58] sm:$0xff]
    %v216 = vld [vmem:[#allocation8 + $0x60] sm:$0xff]
    %v217 = vld [vmem:[#allocation8 + $0x68] sm:$0xff]
    %v218 = vld [vmem:[#allocation8 + $0x70] sm:$0xff]
    %v219 = vld [vmem:[#allocation8 + $0x78] sm:$0xff]
    %v220 = vld [vmem:[#allocation10] sm:$0x1]
    %v222 = vlaneseq
    %v223 = vshrl.u32 %v222, 7
    %v224 = vsub.s32 0, %v223
    %v225 = vrot.slane %v220, %v224
    %227 = vmatprep.subr.mxu0 0.0
    %228 = vmatpush1.msra.mxu0 %v204
    %229 = vmatprep.subr.mxu0 0.0
    %230 = vmatpush1.msra.mxu0 %v205
    %231 = vmatprep.subr.mxu0 0.0
    %232 = vmatpush1.msra.mxu0 %v206
    %233 = vmatprep.subr.mxu0 0.0
    %234 = vmatpush1.msra.mxu0 %v207
    %235 = vmatprep.subr.mxu0 0.0
    %236 = vmatpush1.msra.mxu0 %v208
    %237 = vmatprep.subr.mxu0 0.0
    %238 = vmatpush1.msra.mxu0 %v209
    %239 = vmatprep.subr.mxu0 0.0
    %240 = vmatpush1.msra.mxu0 %v210
    %241 = vmatprep.subr.mxu0 0.0
    %242 = vmatpush1.msra.mxu0 %v211
    %243 = vmatprep.subr.mxu0 0.0
    %244 = vmatpush1.msra.mxu0 %v212
    %245 = vmatprep.subr.mxu0 0.0
    %246 = vmatpush1.msra.mxu0 %v213
    %247 = vmatprep.subr.mxu0 0.0
    %248 = vmatpush1.msra.mxu0 %v214
    %249 = vmatprep.subr.mxu0 0.0
    %250 = vmatpush1.msra.mxu0 %v215
    %251 = vmatprep.subr.mxu0 0.0
    %252 = vmatpush1.msra.mxu0 %v216
    %253 = vmatprep.subr.mxu0 0.0
    %254 = vmatpush1.msra.mxu0 %v217
    %255 = vmatprep.subr.mxu0 0.0
    %256 = vmatpush1.msra.mxu0 %v218
    %257 = vmatprep.subr.mxu0 0.0
    %258 = vmatpush1.msra.mxu0 %v219
    %259 = vmatprep.subr.mxu0 0.0
    %260 = vmatpush1.msra.mxu0 0.0
    %261 = vmatprep.subr.mxu0 0.0
    %262 = vmatpush1.msra.mxu0 0.0
    %263 = vmatprep.subr.mxu0 0.0
    %264 = vmatpush1.msra.mxu0 0.0
    %265 = vmatprep.subr.mxu0 0.0
    %266 = vmatpush1.msra.mxu0 0.0
    %267 = vmatprep.subr.mxu0 0.0
    %268 = vmatpush1.msra.mxu0 0.0
    %269 = vmatprep.subr.mxu0 0.0
    %270 = vmatpush1.msra.mxu0 0.0
    %271 = vmatprep.subr.mxu0 0.0
    %272 = vmatpush1.msra.mxu0 0.0
    %273 = vmatprep.subr.mxu0 0.0
    %274 = vmatpush1.msra.mxu0 0.0
    %275 = vmatprep.subr.mxu0 0.0
    %276 = vmatpush1.msra.mxu0 0.0
    %277 = vmatprep.subr.mxu0 0.0
    %278 = vmatpush1.msra.mxu0 0.0
    %279 = vmatprep.subr.mxu0 0.0
    %280 = vmatpush1.msra.mxu0 0.0
    %281 = vmatprep.subr.mxu0 0.0
    %282 = vmatpush1.msra.mxu0 0.0
    %283 = vmatprep.subr.mxu0 0.0
    %284 = vmatpush1.msra.mxu0 0.0
    %285 = vmatprep.subr.mxu0 0.0
    %286 = vmatpush1.msra.mxu0 0.0
    %287 = vmatprep.subr.mxu0 0.0
    %288 = vmatpush1.msra.mxu0 0.0
    %289 = vmatprep.subr.mxu0 0.0
    %290 = vmatpush1.msra.mxu0 0.0
    %291 = vmatprep.mubr.f32.mxu0 0.0
    %292 = vmatmul.mubr.f32.gmra.mrb[0].mxu0 %v203
    %v293 = vpop.f32.mrb[0].mxu0
    %v294 = vadd.f32 %v225, %v293
    %v295 = vpop.f32.mrb[0].mxu0
    %296 = vdwg.mxu0
    %297 = vst [vmem:[#allocation11] sm:$0xff] %v294
    // Predicated region
    $region42: #{text_encoder_forward.1} parent=1 // pred_check
      _
    $region43: #{text_encoder_forward.1} parent=1 // pred_check_branch
      %299 = sbr.rel (0) target = $region45
    $region44: #{text_encoder_forward.1} parent=1 // pred_region
      %s301 = ssub.s32 128, 128
      %302 = vsyncadd [#allocation4], %s301
      %s304 = sshll.u32 [#allocation11], 4
      %s305 = int_to_ptr.vmem [resolvable:$true] %s304
      %307 = dma.vmem_to_hbm [thread:$0]  %s305, 128, %s5, [#allocation4]
    $region45: #{text_encoder_forward.1} parent=1 // pred_fallthru
      _
    // Predicated region
    $region46: #{text_encoder_forward.1} parent=1 // pred_check
      _
    $region47: #{text_encoder_forward.1} parent=1 // pred_check_branch
      %309 = sbr.rel (0) target = $region49
    $region48: #{text_encoder_forward.1} parent=1 // pred_region
      %310 = dma.done [#allocation4], 128
    $region49: #{text_encoder_forward.1} parent=1 // pred_fallthru
      _
    %311 = vsyncpa [#allocation3], 1
    %312 = vsyncpa [#allocation6], 1
    %313 = vsyncpa [#allocation9], 1
    %314 = vsyncpa [#allocation4], 1

</llo_original>
